<compile_context>
chip_gen: v6e
topology: v6e:2x2x1
jax: 0.10.0
libtpu: 0.0.40
codegen_flags: <defaults>
</compile_context>

<pallas_src>
import jax
import jax.numpy as jnp
from jax import lax
from jax.experimental import pallas as pl
from jax.experimental.pallas import tpu as pltpu

N_EMBD = 384          # n_embedding_dimensions in the PyTorch module
HEAD_SIZE = 64        # head_size passed to Head.__init__
# block_size=256 only sizes the tril buffer in the module; the causal mask is
# built on-the-fly here for the actual sequence length T.

NEG_INF = -1e30       # large finite negative (avoids exp(-inf - -inf) NaN paths)


def head_kernel(x_ref, wqkv_ref, o_ref):
    # x_ref: (T, C) f32 (batch dim squeezed), wqkv_ref: (C, 3H) bf16,
    # o_ref: (T, H) f32. q-columns of wqkv are pre-scaled by C**-0.5.
    h = o_ref.shape[-1]

    x = x_ref[...].astype(jnp.bfloat16)                                # (T, C)

    # Single fused projection on the MXU: [k | q*scale | v]
    qkv = jnp.dot(x, wqkv_ref[...],
                  preferred_element_type=jnp.float32)                  # (T, 3H)
    k = qkv[:, 0:h]
    q = qkv[:, h:2 * h]          # already carries the C**-0.5 scale
    v = qkv[:, 2 * h:3 * h]

    # scores = q @ k^T — contract last dims directly, no explicit transpose.
    scores = lax.dot_general(
        q.astype(jnp.bfloat16), k.astype(jnp.bfloat16),
        dimension_numbers=(((1,), (1,)), ((), ())),
        preferred_element_type=jnp.float32)                            # (T, T)

    # Causal mask (single bool compare, applied once).
    t = scores.shape[0]
    row = lax.broadcasted_iota(jnp.int32, (t, t), 0)
    col = lax.broadcasted_iota(jnp.int32, (t, t), 1)
    scores = jnp.where(col <= row, scores, NEG_INF)

    # Numerically-stable softmax; normalization deferred until after PV.
    m = jnp.max(scores, axis=-1, keepdims=True)                        # (T, 1)
    p = jnp.exp(scores - m)                                            # (T, T)
    denom = jnp.sum(p, axis=-1, keepdims=True)                         # (T, 1)

    # TODO(synk): nn.Dropout(p=0.2) is identity in eval mode (implemented);
    # training-mode dropout would use pltpu.prng_seed/prng_random_bits.

    o = jnp.dot(p.astype(jnp.bfloat16), v.astype(jnp.bfloat16),
                preferred_element_type=jnp.float32)                    # (T, H)
    o = o * pl.reciprocal(denom, approx=True)                          # EUP recip
    o_ref[...] = o.astype(o_ref.dtype)


def head_forward(x, wk, wq, wv):
    """x: (B, T, C) f32; wk/wq/wv: (C, H) f32. Returns (B, T, H) f32."""
    B, T, C = x.shape
    H = wk.shape[1]
    scale = C ** (-0.5)  # NOTE: module scales by C**-0.5 (embed dim), not H**-0.5

    # Fused QKV weight in bf16; fold the score scale into the q columns so the
    # (T, T) score scaling disappears from the kernel entirely.
    wqkv = jnp.concatenate([wk, wq * scale, wv], axis=1).astype(jnp.bfloat16)

    return pl.pallas_call(
        head_kernel,
        out_shape=jax.ShapeDtypeStruct((B, T, H), x.dtype),
        grid_spec=pltpu.PrefetchScalarGridSpec(
            num_scalar_prefetch=0,
            grid=(B,),
            in_specs=[
                pl.BlockSpec((None, T, C), lambda b: (b, 0, 0)),   # x, batch squeezed
                pl.BlockSpec((C, 3 * H), lambda b: (0, 0)),        # fused weight (invariant)
            ],
            out_specs=pl.BlockSpec((None, T, H), lambda b: (b, 0, 0)),
        ),
        compiler_params=pltpu.CompilerParams(
            dimension_semantics=("parallel",)),   # batch axis -> megacore sharding
    )(x, wqkv)
    # NOTE: for much longer T (e.g. block_size=256+ and beyond), switch to a
    # flash-style kv-tiled grid so the (T, T) scores block stays within VMEM
    # limits (especially v7x's 64 MiB) and the grid has >B pipeline steps.


def head_reference(x, wk, wq, wv):
    """Pure-JAX f32 reference mirroring the PyTorch forward (eval mode)."""
    B, T, C = x.shape
    k = x @ wk
    q = x @ wq
    v = x @ wv
    weights = jnp.einsum("btd,bsd->bts", q, k) * C ** (-0.5)
    mask = jnp.tril(jnp.ones((T, T), dtype=bool))
    weights = jnp.where(mask, weights, -jnp.inf)
    weights = jax.nn.softmax(weights, axis=-1)
    return weights @ v


if __name__ == "__main__":
    key = jax.random.PRNGKey(0)
    kx, kk, kq, kv = jax.random.split(key, 4)

    B, T, C, H = 2, 128, N_EMBD, HEAD_SIZE

    x = jax.random.normal(kx, (B, T, C), dtype=jnp.float32)

    # Deterministic weight init matching nn.Linear's U(-1/sqrt(C), 1/sqrt(C)),
    # stored directly in (C, H) layout.
    bound = 1.0 / (C ** 0.5)
    wk = jax.random.uniform(kk, (C, H), jnp.float32, -bound, bound)
    wq = jax.random.uniform(kq, (C, H), jnp.float32, -bound, bound)
    wv = jax.random.uniform(kv, (C, H), jnp.float32, -bound, bound)

    out = head_forward(x, wk, wq, wv)
    out = jax.block_until_ready(out)

    ref = head_reference(x, wk, wq, wv)
    assert out.shape == (B, T, H)
    # bf16 matmul inputs with f32 accumulation -> slightly looser tolerance.
    assert jnp.allclose(out, ref, atol=2e-2, rtol=2e-2), "mismatch vs reference"

    print("KERNEL_OK")
</pallas_src>

<mosaic_0001>
module attributes {stable_mosaic.version = 11 : i64} {
  func.func @head_kernel(%arg0: i32, %arg1: memref<1x128x384xf32, #tpu.memory_space<vmem>>, %arg2: memref<384x192xbf16, #tpu.memory_space<vmem>>, %arg3: memref<1x128x64xf32, #tpu.memory_space<vmem>>) attributes {dimension_semantics = [#tpu.dimension_semantics<parallel>], iteration_bounds = array<i64: 2>, scalar_prefetch = 0 : i64, scratch_operands = 0 : i64, tpu.core_type = #tpu.core_type<tc>, window_params = [{transform_indices = @transform_0, window_bounds = array<i64: 1, 128, 384>}, {pipeline_mode = #tpu.pipeline_mode<synchronous>, transform_indices = @transform_1, window_bounds = array<i64: 384, 192>}, {transform_indices = @transform_2, window_bounds = array<i64: 1, 128, 64>}]} {
    %c0 = arith.constant 0 : index
    %c0_0 = arith.constant 0 : index
    %c0_1 = arith.constant 0 : index
    %0 = vector.load %arg1[%c0, %c0_0, %c0_1] : memref<1x128x384xf32, #tpu.memory_space<vmem>>, vector<1x128x384xf32>
    %1 = vector.shape_cast %0 : vector<1x128x384xf32> to vector<128x384xf32>
    %2 = arith.truncf %1 : vector<128x384xf32> to vector<128x384xbf16>
    %c0_2 = arith.constant 0 : index
    %c0_3 = arith.constant 0 : index
    %3 = vector.load %arg2[%c0_2, %c0_3] : memref<384x192xbf16, #tpu.memory_space<vmem>>, vector<384x192xbf16>
    %cst = arith.constant dense<0.000000e+00> : vector<128x192xf32>
    %4 = tpu.matmul %2, %3, %cst {dimension_numbers = #tpu.dot_dimension_numbers<[1], [0], [0], [1], [0, 0, 1, 1], [], []>} : vector<128x384xbf16>, vector<384x192xbf16>, vector<128x192xf32> -> vector<128x192xf32>
    %5 = vector.extract_strided_slice %4 {offsets = [0, 0], sizes = [128, 64], strides = [1, 1]} : vector<128x192xf32> to vector<128x64xf32>
    %6 = vector.extract_strided_slice %4 {offsets = [0, 64], sizes = [128, 64], strides = [1, 1]} : vector<128x192xf32> to vector<128x64xf32>
    %7 = vector.extract_strided_slice %4 {offsets = [0, 128], sizes = [128, 64], strides = [1, 1]} : vector<128x192xf32> to vector<128x64xf32>
    %8 = arith.truncf %6 : vector<128x64xf32> to vector<128x64xbf16>
    %9 = arith.truncf %5 : vector<128x64xf32> to vector<128x64xbf16>
    %cst_4 = arith.constant dense<0.000000e+00> : vector<128x128xf32>
    %10 = tpu.matmul %8, %9, %cst_4 {dimension_numbers = #tpu.dot_dimension_numbers<[1], [1], [0], [0], [0, 0, 1, 0], [], []>} : vector<128x64xbf16>, vector<128x64xbf16>, vector<128x128xf32> -> vector<128x128xf32>
    %11 = tpu.iota {dimensions = array<i32: 0>} : vector<128x128xi32>
    %12 = tpu.iota {dimensions = array<i32: 1>} : vector<128x128xi32>
    %13 = arith.cmpi sle, %12, %11 : vector<128x128xi32>
    %cst_5 = arith.constant -1.000000e+30 : f32
    %14 = vector.broadcast %cst_5 : f32 to vector<128x128xf32>
    %15 = arith.select %13, %10, %14 : vector<128x128xi1>, vector<128x128xf32>
    %cst_6 = arith.constant dense<0xFF800000> : vector<128xf32>
    %16 = vector.multi_reduction <maximumf>, %15, %cst_6 [1] : vector<128x128xf32> to vector<128xf32>
    %17 = vector.shape_cast %16 : vector<128xf32> to vector<128x1xf32>
    %18 = vector.broadcast %17 : vector<128x1xf32> to vector<128x128xf32>
    %19 = arith.subf %15, %18 : vector<128x128xf32>
    %20 = math.exp %19 : vector<128x128xf32>
    %cst_7 = arith.constant dense<0.000000e+00> : vector<128xf32>
    %21 = vector.multi_reduction <add>, %20, %cst_7 [1] : vector<128x128xf32> to vector<128xf32>
    %22 = vector.shape_cast %21 : vector<128xf32> to vector<128x1xf32>
    %23 = arith.truncf %20 : vector<128x128xf32> to vector<128x128xbf16>
    %24 = arith.truncf %7 : vector<128x64xf32> to vector<128x64xbf16>
    %cst_8 = arith.constant dense<0.000000e+00> : vector<128x64xf32>
    %25 = tpu.matmul %23, %24, %cst_8 {dimension_numbers = #tpu.dot_dimension_numbers<[1], [0], [0], [1], [0, 0, 1, 1], [], []>} : vector<128x128xbf16>, vector<128x64xbf16>, vector<128x64xf32> -> vector<128x64xf32>
    %26 = tpu.reciprocal %22 {approx = true} : vector<128x1xf32> -> vector<128x1xf32>
    %27 = vector.broadcast %26 : vector<128x1xf32> to vector<128x64xf32>
    %28 = arith.mulf %25, %27 : vector<128x64xf32>
    %c0_9 = arith.constant 0 : index
    %c0_10 = arith.constant 0 : index
    %c0_11 = arith.constant 0 : index
    %29 = vector.load %arg3[%c0_9, %c0_10, %c0_11] : memref<1x128x64xf32, #tpu.memory_space<vmem>>, vector<1x128x64xf32>
    %30 = vector.shape_cast %29 : vector<1x128x64xf32> to vector<128x64xf32>
    %31 = vector.shape_cast %28 : vector<128x64xf32> to vector<1x128x64xf32>
    tpu.vector_store %arg3[%c0_9, %c0_10, %c0_11], %31 {strides = array<i32>} : memref<1x128x64xf32, #tpu.memory_space<vmem>>, vector<1x128x64xf32>,
    return
  }
  func.func @transform_0(%arg0: i32) -> (i32, i32, i32) {
    %c0_i32 = arith.constant 0 : i32
    %c0_i32_0 = arith.constant 0 : i32
    %c0_i32_1 = arith.constant 0 : i32
    return %arg0, %c0_i32, %c0_i32_0 : i32, i32, i32
  }
  func.func @transform_1(%arg0: i32) -> (i32, i32) {
    %c0_i32 = arith.constant 0 : i32
    %c0_i32_0 = arith.constant 0 : i32
    %c0_i32_1 = arith.constant 0 : i32
    return %c0_i32, %c0_i32_0 : i32, i32
  }
  func.func @transform_2(%arg0: i32) -> (i32, i32, i32) {
    %c0_i32 = arith.constant 0 : i32
    %c0_i32_0 = arith.constant 0 : i32
    %c0_i32_1 = arith.constant 0 : i32
    return %arg0, %c0_i32, %c0_i32_0 : i32, i32, i32
  }
}

</mosaic_0001>

<llo_original>
// kernel: tpu_custom_call.1
$region0: #{tpu_custom_call.1}
  #allocation0 [shape = 'u32[]', space=smem, size = 0x4, offset = 0x4, fixed_abs, tag = 'smem constant byte address 0x4 - core index']
  #allocation1 [shape = 'u32[144,128]{1,0:T(1,128)}', space=vmem, size = 0x12000, scoped, tag = 'internal scratch']
  %s0 = inlined_call_operand.hbm [shape: f32[2,128,384], index: 0, kind: input, shape index: {}]
  %s1 = inlined_call_operand.vmem [shape: bf16[384,192], index: 1, kind: input, shape index: {}]
  %s2 = inlined_call_operand.vmem [shape: f32[2,128,64], index: 2, kind: output, shape index: {}]
  %s3 = sld [smem:[#allocation0]]
  $region45: #{tpu_custom_call.1} parent=0
    _
  %s5 = ssub.s32 1, %s3
  %s6 = scalar_select 0, %s5, %s3
  $region1: #{tpu_custom_call.1} parent=0
    #allocation2 [shape = 'u8[393216]{0}', space=vmem, size = 0x60000, scoped, tag = 'input window, operand 0']
    #allocation3 [shape = 's32[2]{0}', space=sflag, size = 0x8, scoped, tag = 'scoped memory for tpu_custom_call.1']
    %7 = vsyncpa [#allocation3], 0
    %s8 = scalar_lea.sflag [#allocation3], 1
    %9 = vsyncpa %s8, 0
    loop: start=0, step=1, limit=4
    $region2: #{tpu_custom_call.1} parent=1 // loop_pre_header
      _
    $region3: #{tpu_custom_call.1} parent=1 // loop_header
      %s11 = sphi 0, %s15
      %p12 = scmp.ge.s32.totalorder %s11, 4
      %s21 = sphi 0, %s23
      %s24 = sphi 0, %s21
      %s25 = sphi 0, %s24
      %s41 = sphi 0, %s25
      %s45 = sphi 0, %s45
      %s47 = sphi 0, %s45
      %s48 = sphi 0, %s47
      %s62 = sphi 0, %s48
      %s68 = sphi 0, %s70
      %s71 = sphi 0, %s68
      %s72 = sphi 0, %s71
      %s88 = sphi 0, %s72
    $region4: #{tpu_custom_call.1} parent=1 // loop_header_branch
      %14 = sbr.rel (%p12) target = $region8
    $region5: #{tpu_custom_call.1} parent=1 // loop_body
      %s16 = ssub.s32 %s11, 1
      %s17 = ssub.s32 %s11, 2
      %s18 = sadd.s32 %s11, 1
      %s19 = ssub.s32 %s11, %s18
      %p20 = scmp.eq.s32.totalorder %s19, 0
      %s22 = sadd.s32 %s21, 1
      %s23 = scalar_select %p20, %s21, %s22
      %p26 = pneg %p20
      %p27 = scmp.eq.s32.totalorder %s11, 1
      %p28 = por %p26, %p27
      %p29 = scmp.ne.s32.totalorder %s21, %s24
      %p30 = scmp.eq.s32.totalorder %s11, 0
      %p31 = por %p29, %p30
      %p32 = scmp.ne.s32.totalorder %s21, %s24
      %p33 = scmp.eq.s32.totalorder %s16, 1
      %p34 = por %p32, %p33
      %p35 = scmp.ne.s32.totalorder %s24, %s25
      %p36 = scmp.eq.s32.totalorder %s16, 0
      %p37 = por %p35, %p36
      %p38 = scmp.ne.s32.totalorder %s24, %s25
      %p39 = scmp.eq.s32.totalorder %s17, 1
      %p40 = por %p38, %p39
      %p42 = scmp.ne.s32.totalorder %s25, %s41
      %p43 = scmp.eq.s32.totalorder %s17, 0
      %p44 = por %p42, %p43
      %s46 = sadd.s32 %s45, 1
      %p49 = scmp.eq.s32.totalorder %s11, 1
      %p50 = scmp.ne.s32.totalorder %s45, %s47
      %p51 = scmp.eq.s32.totalorder %s11, 0
      %p52 = por %p50, %p51
      %p53 = scmp.ne.s32.totalorder %s45, %s47
      %p54 = scmp.eq.s32.totalorder %s16, 1
      %p55 = por %p53, %p54
      %p56 = scmp.ne.s32.totalorder %s47, %s48
      %p57 = scmp.eq.s32.totalorder %s16, 0
      %p58 = por %p56, %p57
      %p59 = scmp.ne.s32.totalorder %s47, %s48
      %p60 = scmp.eq.s32.totalorder %s17, 1
      %p61 = por %p59, %p60
      %p63 = scmp.ne.s32.totalorder %s48, %s62
      %p64 = scmp.eq.s32.totalorder %s17, 0
      %p65 = por %p63, %p64
      %s66 = ssub.s32 %s11, %s18
      %p67 = scmp.eq.s32.totalorder %s66, 0
      %s69 = sadd.s32 %s68, 1
      %s70 = scalar_select %p67, %s68, %s69
      %p73 = pneg %p67
      %p74 = scmp.eq.s32.totalorder %s11, 1
      %p75 = por %p73, %p74
      %p76 = scmp.ne.s32.totalorder %s68, %s71
      %p77 = scmp.eq.s32.totalorder %s11, 0
      %p78 = por %p76, %p77
      %p79 = scmp.ne.s32.totalorder %s68, %s71
      %p80 = scmp.eq.s32.totalorder %s16, 1
      %p81 = por %p79, %p80
      %p82 = scmp.ne.s32.totalorder %s71, %s72
      %p83 = scmp.eq.s32.totalorder %s16, 0
      %p84 = por %p82, %p83
      %p85 = scmp.ne.s32.totalorder %s71, %s72
      %p86 = scmp.eq.s32.totalorder %s17, 1
      %p87 = por %p85, %p86
      %p89 = scmp.ne.s32.totalorder %s72, %s88
      %p90 = scmp.eq.s32.totalorder %s17, 0
      %p91 = por %p89, %p90
      %p92 = scmp.le.s32.totalorder 1, %s11
      %p93 = scmp.lt.s32.totalorder %s11, 3
      %p94 = pnand %p92, %p93
      %p95 = pneg %p94
      // Predicated region
      $region9: #{tpu_custom_call.1} parent=5 // pred_check
        _
      $region10: #{tpu_custom_call.1} parent=5 // pred_check_branch
        %97 = sbr.rel (%p94) target = $region12
      $region11: #{tpu_custom_call.1} parent=5 // pred_region
        %s98 = ssub.s32 %s11, 1
        // Predicated region
        $region13: #{tpu_custom_call.1} parent=11 // pred_check
          %p99 = pneg %p58
        $region14: #{tpu_custom_call.1} parent=11 // pred_check_branch
          %101 = sbr.rel (%p99) target = $region16
        $region15: #{tpu_custom_call.1} parent=11 // pred_region
          _
        $region16: #{tpu_custom_call.1} parent=11 // pred_fallthru
          _
      $region12: #{tpu_custom_call.1} parent=5 // pred_fallthru
        _
      %p102 = scmp.lt.s32.totalorder %s11, 2
      // Predicated region
      $region17: #{tpu_custom_call.1} parent=5 // pred_check
        %p103 = pneg %p102
      $region18: #{tpu_custom_call.1} parent=5 // pred_check_branch
        %105 = sbr.rel (%p103) target = $region20
      $region19: #{tpu_custom_call.1} parent=5 // pred_region
        // Predicated region
        $region21: #{tpu_custom_call.1} parent=19 // pred_check
          %p106 = pneg %p31
        $region22: #{tpu_custom_call.1} parent=19 // pred_check_branch
          %108 = sbr.rel (%p106) target = $region24
        $region23: #{tpu_custom_call.1} parent=19 // pred_region
          %s109 = sand.u32 %s21, 1
          %s110 = scalar_lea.sflag [#allocation3], %s109
          %s111 = sand.u32 %s21, 1
          %s112 = smul.addr %s111, 384
          %s113 = scalar_lea.vmem [#allocation2], %s112
          %s115 = ssub.s32 6144, 6144
          %116 = vsyncadd %s110, %s115
          %s117 = smul.addr %s11, 48
          %s118 = smul.addr %s117, 128
          %s119 = scalar_lea.hbm %s0, %s118
          %s120 = sshll.u32 %s113, 4
          %s121 = int_to_ptr.vmem [resolvable:$true] %s120
          %126 = dma.hbm_to_vmem [thread:$0]  %s119, 6144, %s121, %s110, 384, 384, 24
        $region24: #{tpu_custom_call.1} parent=19 // pred_fallthru
          _
      $region20: #{tpu_custom_call.1} parent=5 // pred_fallthru
        _
      %p127 = scmp.le.s32.totalorder 1, %s11
      %p128 = scmp.lt.s32.totalorder %s11, 3
      %p129 = pnand %p127, %p128
      %p130 = pneg %p129
      // Predicated region
      $region25: #{tpu_custom_call.1} parent=5 // pred_check
        _
      $region26: #{tpu_custom_call.1} parent=5 // pred_check_branch
        %132 = sbr.rel (%p129) target = $region28
      $region27: #{tpu_custom_call.1} parent=5 // pred_region
        %s133 = ssub.s32 %s11, 1
        %s134 = sand.u32 %s24, 1
        %s135 = scalar_lea.sflag [#allocation3], %s134
        %s136 = sand.u32 %s24, 1
        %s137 = smul.addr %s136, 384
        %s138 = scalar_lea.vmem [#allocation2], %s137
        // Predicated region
        $region29: #{tpu_custom_call.1} parent=27 // pred_check
          %p139 = pneg %p37
        $region30: #{tpu_custom_call.1} parent=27 // pred_check_branch
          %141 = sbr.rel (%p139) target = $region32
        $region31: #{tpu_custom_call.1} parent=27 // pred_region
          %142 = dma.done %s135, 6144
        $region32: #{tpu_custom_call.1} parent=27 // pred_fallthru
          _
        %s143 = sand.u32 %s24, 1
        %s144 = scalar_lea.sflag [#allocation3], %s143
        %s145 = sand.u32 %s24, 1
        %s146 = smul.addr %s145, 384
        %s147 = scalar_lea.vmem [#allocation2], %s146
        %p148 = pneg %p37
        %p149 = pneg %p34
        %p150 = pneg %p58
        %p151 = pneg %p55
        %p152 = pneg %p84
        %p153 = pneg %p81
        %p154 = scmp.lt.s32.totalorder %s16, 1
        %s155 = scalar_select %p154, %s16, 1
        %s156 = smul.addr %s155, 16
        %s157 = smul.addr %s156, 8
        %s158 = scalar_lea.vmem %s2, %s157
        %p159 = scmp.lt.s32.totalorder %s16, 1
        %s160 = scalar_select %p159, %s16, 1
        %s161 = smul.addr %s160, 16
        %s162 = smul.addr %s161, 8
        %s163 = scalar_lea.vmem %s2, %s162
        %v165 = vld [vmem:[%s138] sm:$0xff]
        %v166 = vld [vmem:[%s138 + $0x8] sm:$0xff]
        %v167 = vld [vmem:[%s138 + $0x10] sm:$0xff]
        %v168 = vld [vmem:[%s138 + $0x18] sm:$0xff]
        %v169 = vld [vmem:[%s138 + $0x20] sm:$0xff]
        %v170 = vld [vmem:[%s138 + $0x28] sm:$0xff]
        %v171 = vld [vmem:[%s138 + $0x30] sm:$0xff]
        %v172 = vld [vmem:[%s138 + $0x38] sm:$0xff]
        %v173 = vld [vmem:[%s138 + $0x40] sm:$0xff]
        %v174 = vld [vmem:[%s138 + $0x48] sm:$0xff]
        %v175 = vld [vmem:[%s138 + $0x50] sm:$0xff]
        %v176 = vld [vmem:[%s138 + $0x58] sm:$0xff]
        %v177 = vld [vmem:[%s138 + $0x60] sm:$0xff]
        %v178 = vld [vmem:[%s138 + $0x68] sm:$0xff]
        %v179 = vld [vmem:[%s138 + $0x70] sm:$0xff]
        %v180 = vld [vmem:[%s138 + $0x78] sm:$0xff]
        %v181 = vld [vmem:[%s138 + $0x80] sm:$0xff]
        %v182 = vld [vmem:[%s138 + $0x88] sm:$0xff]
        %v183 = vld [vmem:[%s138 + $0x90] sm:$0xff]
        %v184 = vld [vmem:[%s138 + $0x98] sm:$0xff]
        %v185 = vld [vmem:[%s138 + $0xa0] sm:$0xff]
        %v186 = vld [vmem:[%s138 + $0xa8] sm:$0xff]
        %v187 = vld [vmem:[%s138 + $0xb0] sm:$0xff]
        %v188 = vld [vmem:[%s138 + $0xb8] sm:$0xff]
        %v189 = vld [vmem:[%s138 + $0xc0] sm:$0xff]
        %v190 = vld [vmem:[%s138 + $0xc8] sm:$0xff]
        %v191 = vld [vmem:[%s138 + $0xd0] sm:$0xff]
        %v192 = vld [vmem:[%s138 + $0xd8] sm:$0xff]
        %v193 = vld [vmem:[%s138 + $0xe0] sm:$0xff]
        %v194 = vld [vmem:[%s138 + $0xe8] sm:$0xff]
        %v195 = vld [vmem:[%s138 + $0xf0] sm:$0xff]
        %v196 = vld [vmem:[%s138 + $0xf8] sm:$0xff]
        %v197 = vld [vmem:[%s138 + $0x100] sm:$0xff]
        %v198 = vld [vmem:[%s138 + $0x108] sm:$0xff]
        %v199 = vld [vmem:[%s138 + $0x110] sm:$0xff]
        %v200 = vld [vmem:[%s138 + $0x118] sm:$0xff]
        %v201 = vld [vmem:[%s138 + $0x120] sm:$0xff]
        %v202 = vld [vmem:[%s138 + $0x128] sm:$0xff]
        %v203 = vld [vmem:[%s138 + $0x130] sm:$0xff]
        %v204 = vld [vmem:[%s138 + $0x138] sm:$0xff]
        %v205 = vld [vmem:[%s138 + $0x140] sm:$0xff]
        %v206 = vld [vmem:[%s138 + $0x148] sm:$0xff]
        %v207 = vld [vmem:[%s138 + $0x150] sm:$0xff]
        %v208 = vld [vmem:[%s138 + $0x158] sm:$0xff]
        %v209 = vld [vmem:[%s138 + $0x160] sm:$0xff]
        %v210 = vld [vmem:[%s138 + $0x168] sm:$0xff]
        %v211 = vld [vmem:[%s138 + $0x170] sm:$0xff]
        %v212 = vld [vmem:[%s138 + $0x178] sm:$0xff]
        %v213 = vpack.c.bf16 %v168, %v165
        %v214 = vpack.c.bf16 %v169, %v166
        %v215 = vpack.c.bf16 %v170, %v167
        %v216 = vpack.c.bf16 %v174, %v171
        %v217 = vpack.c.bf16 %v175, %v172
        %v218 = vpack.c.bf16 %v176, %v173
        %v219 = vpack.c.bf16 %v180, %v177
        %v220 = vpack.c.bf16 %v181, %v178
        %v221 = vpack.c.bf16 %v182, %v179
        %v222 = vpack.c.bf16 %v186, %v183
        %v223 = vpack.c.bf16 %v187, %v184
        %v224 = vpack.c.bf16 %v188, %v185
        %v225 = vpack.c.bf16 %v192, %v189
        %v226 = vpack.c.bf16 %v193, %v190
        %v227 = vpack.c.bf16 %v194, %v191
        %v228 = vpack.c.bf16 %v198, %v195
        %v229 = vpack.c.bf16 %v199, %v196
        %v230 = vpack.c.bf16 %v200, %v197
        %v231 = vpack.c.bf16 %v204, %v201
        %v232 = vpack.c.bf16 %v205, %v202
        %v233 = vpack.c.bf16 %v206, %v203
        %v234 = vpack.c.bf16 %v210, %v207
        %v235 = vpack.c.bf16 %v211, %v208
        %v236 = vpack.c.bf16 %v212, %v209
        %v237 = vld [vmem:[%s1] sm:$0xff]
        %v238 = vld [vmem:[%s1 + $0x8] sm:$0xff]
        %v239 = vld [vmem:[%s1 + $0x10] sm:$0xff]
        %v240 = vld [vmem:[%s1 + $0x18] sm:$0xff]
        %v241 = vld [vmem:[%s1 + $0x20] sm:$0xff]
        %v242 = vld [vmem:[%s1 + $0x28] sm:$0xff]
        %v243 = vld [vmem:[%s1 + $0x30] sm:$0xff]
        %v244 = vld [vmem:[%s1 + $0x38] sm:$0xff]
        %v245 = vld [vmem:[%s1 + $0x40] sm:$0xff]
        %v246 = vld [vmem:[%s1 + $0x48] sm:$0xff]
        %v247 = vld [vmem:[%s1 + $0x50] sm:$0xff]
        %v248 = vld [vmem:[%s1 + $0x58] sm:$0xff]
        %v249 = vld [vmem:[%s1 + $0x60] sm:$0xff]
        %v250 = vld [vmem:[%s1 + $0x68] sm:$0xff]
        %v251 = vld [vmem:[%s1 + $0x70] sm:$0xff]
        %v252 = vld [vmem:[%s1 + $0x78] sm:$0xff]
        %v253 = vld [vmem:[%s1 + $0x80] sm:$0xff]
        %v254 = vld [vmem:[%s1 + $0x88] sm:$0xff]
        %v255 = vld [vmem:[%s1 + $0x90] sm:$0xff]
        %v256 = vld [vmem:[%s1 + $0x98] sm:$0xff]
        %v257 = vld [vmem:[%s1 + $0xa0] sm:$0xff]
        %v258 = vld [vmem:[%s1 + $0xa8] sm:$0xff]
        %v259 = vld [vmem:[%s1 + $0xb0] sm:$0xff]
        %v260 = vld [vmem:[%s1 + $0xb8] sm:$0xff]
        %v261 = vld [vmem:[%s1 + $0xc0] sm:$0xff]
        %v262 = vld [vmem:[%s1 + $0xc8] sm:$0xff]
        %v263 = vld [vmem:[%s1 + $0xd0] sm:$0xff]
        %v264 = vld [vmem:[%s1 + $0xd8] sm:$0xff]
        %v265 = vld [vmem:[%s1 + $0xe0] sm:$0xff]
        %v266 = vld [vmem:[%s1 + $0xe8] sm:$0xff]
        %v267 = vld [vmem:[%s1 + $0xf0] sm:$0xff]
        %v268 = vld [vmem:[%s1 + $0xf8] sm:$0xff]
        %v269 = vld [vmem:[%s1 + $0x100] sm:$0xff]
        %v270 = vld [vmem:[%s1 + $0x108] sm:$0xff]
        %v271 = vld [vmem:[%s1 + $0x110] sm:$0xff]
        %v272 = vld [vmem:[%s1 + $0x118] sm:$0xff]
        %v273 = vld [vmem:[%s1 + $0x120] sm:$0xff]
        %v274 = vld [vmem:[%s1 + $0x128] sm:$0xff]
        %v275 = vld [vmem:[%s1 + $0x130] sm:$0xff]
        %v276 = vld [vmem:[%s1 + $0x138] sm:$0xff]
        %v277 = vld [vmem:[%s1 + $0x140] sm:$0xff]
        %v278 = vld [vmem:[%s1 + $0x148] sm:$0xff]
        %v279 = vld [vmem:[%s1 + $0x150] sm:$0xff]
        %v280 = vld [vmem:[%s1 + $0x158] sm:$0xff]
        %v281 = vld [vmem:[%s1 + $0x160] sm:$0xff]
        %v282 = vld [vmem:[%s1 + $0x168] sm:$0xff]
        %v283 = vld [vmem:[%s1 + $0x170] sm:$0xff]
        %v284 = vld [vmem:[%s1 + $0x178] sm:$0xff]
        %v333 = vunpack.c.l.b16 %v237
        %v334 = vunpack.c.h.b16 %v237
        %v335 = vunpack.c.l.b16 %v238
        %v336 = vunpack.c.h.b16 %v238
        %v337 = vunpack.c.l.b16 %v239
        %v338 = vunpack.c.h.b16 %v239
        %v339 = vunpack.c.l.b16 %v240
        %v340 = vunpack.c.h.b16 %v240
        %v341 = vunpack.c.l.b16 %v241
        %v342 = vunpack.c.h.b16 %v241
        %v343 = vunpack.c.l.b16 %v242
        %v344 = vunpack.c.h.b16 %v242
        %v345 = vunpack.c.l.b16 %v243
        %v346 = vunpack.c.h.b16 %v243
        %v347 = vunpack.c.l.b16 %v244
        %v348 = vunpack.c.h.b16 %v244
        %v349 = vunpack.c.l.b16 %v245
        %v350 = vunpack.c.h.b16 %v245
        %v351 = vunpack.c.l.b16 %v246
        %v352 = vunpack.c.h.b16 %v246
        %v353 = vunpack.c.l.b16 %v247
        %v354 = vunpack.c.h.b16 %v247
        %v355 = vunpack.c.l.b16 %v248
        %v356 = vunpack.c.h.b16 %v248
        %v357 = vunpack.c.l.b16 %v249
        %v358 = vunpack.c.h.b16 %v249
        %v359 = vunpack.c.l.b16 %v250
        %v360 = vunpack.c.h.b16 %v250
        %v361 = vunpack.c.l.b16 %v251
        %v362 = vunpack.c.h.b16 %v251
        %v363 = vunpack.c.l.b16 %v252
        %v364 = vunpack.c.h.b16 %v252
        %v365 = vunpack.c.l.b16 %v253
        %v366 = vunpack.c.h.b16 %v253
        %v367 = vunpack.c.l.b16 %v254
        %v368 = vunpack.c.h.b16 %v254
        %v369 = vunpack.c.l.b16 %v255
        %v370 = vunpack.c.h.b16 %v255
        %v371 = vunpack.c.l.b16 %v256
        %v372 = vunpack.c.h.b16 %v256
        %v373 = vunpack.c.l.b16 %v257
        %v374 = vunpack.c.h.b16 %v257
        %v375 = vunpack.c.l.b16 %v258
        %v376 = vunpack.c.h.b16 %v258
        %v377 = vunpack.c.l.b16 %v259
        %v378 = vunpack.c.h.b16 %v259
        %v379 = vunpack.c.l.b16 %v260
        %v380 = vunpack.c.h.b16 %v260
        %v381 = vunpack.c.l.b16 %v261
        %v382 = vunpack.c.h.b16 %v261
        %v383 = vunpack.c.l.b16 %v262
        %v384 = vunpack.c.h.b16 %v262
        %v385 = vunpack.c.l.b16 %v263
        %v386 = vunpack.c.h.b16 %v263
        %v387 = vunpack.c.l.b16 %v264
        %v388 = vunpack.c.h.b16 %v264
        %v389 = vunpack.c.l.b16 %v265
        %v390 = vunpack.c.h.b16 %v265
        %v391 = vunpack.c.l.b16 %v266
        %v392 = vunpack.c.h.b16 %v266
        %v393 = vunpack.c.l.b16 %v267
        %v394 = vunpack.c.h.b16 %v267
        %v395 = vunpack.c.l.b16 %v268
        %v396 = vunpack.c.h.b16 %v268
        %v397 = vunpack.c.l.b16 %v269
        %v398 = vunpack.c.h.b16 %v269
        %v399 = vunpack.c.l.b16 %v270
        %v400 = vunpack.c.h.b16 %v270
        %v401 = vunpack.c.l.b16 %v271
        %v402 = vunpack.c.h.b16 %v271
        %v403 = vunpack.c.l.b16 %v272
        %v404 = vunpack.c.h.b16 %v272
        %v405 = vunpack.c.l.b16 %v273
        %v406 = vunpack.c.h.b16 %v273
        %v407 = vunpack.c.l.b16 %v274
        %v408 = vunpack.c.h.b16 %v274
        %v409 = vunpack.c.l.b16 %v275
        %v410 = vunpack.c.h.b16 %v275
        %v411 = vunpack.c.l.b16 %v276
        %v412 = vunpack.c.h.b16 %v276
        %v413 = vunpack.c.l.b16 %v277
        %v414 = vunpack.c.h.b16 %v277
        %v415 = vunpack.c.l.b16 %v278
        %v416 = vunpack.c.h.b16 %v278
        %v417 = vunpack.c.l.b16 %v279
        %v418 = vunpack.c.h.b16 %v279
        %v419 = vunpack.c.l.b16 %v280
        %v420 = vunpack.c.h.b16 %v280
        %v421 = vunpack.c.l.b16 %v281
        %v422 = vunpack.c.h.b16 %v281
        %v423 = vunpack.c.l.b16 %v282
        %v424 = vunpack.c.h.b16 %v282
        %v425 = vunpack.c.l.b16 %v283
        %v426 = vunpack.c.h.b16 %v283
        %v427 = vunpack.c.l.b16 %v284
        %v428 = vunpack.c.h.b16 %v284
        %v429 = vpack.c.b16 %v335, %v333
        %v430 = vpack.c.b16 %v336, %v334
        %v431 = vpack.c.b16 %v339, %v337
        %v432 = vpack.c.b16 %v340, %v338
        %v433 = vpack.c.b16 %v343, %v341
        %v434 = vpack.c.b16 %v344, %v342
        %v435 = vpack.c.b16 %v347, %v345
        %v436 = vpack.c.b16 %v348, %v346
        %v437 = vpack.c.b16 %v351, %v349
        %v438 = vpack.c.b16 %v352, %v350
        %v439 = vpack.c.b16 %v355, %v353
        %v440 = vpack.c.b16 %v356, %v354
        %v441 = vpack.c.b16 %v359, %v357
        %v442 = vpack.c.b16 %v360, %v358
        %v443 = vpack.c.b16 %v363, %v361
        %v444 = vpack.c.b16 %v364, %v362
        %v445 = vpack.c.b16 %v367, %v365
        %v446 = vpack.c.b16 %v368, %v366
        %v447 = vpack.c.b16 %v371, %v369
        %v448 = vpack.c.b16 %v372, %v370
        %v449 = vpack.c.b16 %v375, %v373
        %v450 = vpack.c.b16 %v376, %v374
        %v451 = vpack.c.b16 %v379, %v377
        %v452 = vpack.c.b16 %v380, %v378
        %v453 = vpack.c.b16 %v383, %v381
        %v454 = vpack.c.b16 %v384, %v382
        %v455 = vpack.c.b16 %v387, %v385
        %v456 = vpack.c.b16 %v388, %v386
        %v457 = vpack.c.b16 %v391, %v389
        %v458 = vpack.c.b16 %v392, %v390
        %v459 = vpack.c.b16 %v395, %v393
        %v460 = vpack.c.b16 %v396, %v394
        %v461 = vpack.c.b16 %v399, %v397
        %v462 = vpack.c.b16 %v400, %v398
        %v463 = vpack.c.b16 %v403, %v401
        %v464 = vpack.c.b16 %v404, %v402
        %v465 = vpack.c.b16 %v407, %v405
        %v466 = vpack.c.b16 %v408, %v406
        %v467 = vpack.c.b16 %v411, %v409
        %v468 = vpack.c.b16 %v412, %v410
        %v469 = vpack.c.b16 %v415, %v413
        %v470 = vpack.c.b16 %v416, %v414
        %v471 = vpack.c.b16 %v419, %v417
        %v472 = vpack.c.b16 %v420, %v418
        %v473 = vpack.c.b16 %v423, %v421
        %v474 = vpack.c.b16 %v424, %v422
        %v475 = vpack.c.b16 %v427, %v425
        %v476 = vpack.c.b16 %v428, %v426
        %525 = vmatprep.subr.bf16.mxu0 %v444
        %526 = vmatpush1.bf16.msra.mxu0 %v443
        %527 = vmatprep.subr.bf16.mxu0 %v442
        %528 = vmatpush1.bf16.msra.mxu0 %v441
        %529 = vmatprep.subr.bf16.mxu0 %v440
        %530 = vmatpush1.bf16.msra.mxu0 %v439
        %531 = vmatprep.subr.bf16.mxu0 %v438
        %532 = vmatpush1.bf16.msra.mxu0 %v437
        %533 = vmatprep.subr.bf16.mxu0 %v436
        %534 = vmatpush1.bf16.msra.mxu0 %v435
        %535 = vmatprep.subr.bf16.mxu0 %v434
        %536 = vmatpush1.bf16.msra.mxu0 %v433
        %537 = vmatprep.subr.bf16.mxu0 %v432
        %538 = vmatpush1.bf16.msra.mxu0 %v431
        %539 = vmatprep.subr.bf16.mxu0 %v430
        %540 = vmatpush1.bf16.msra.mxu0 %v429
        %541 = vmatprep.subr.bf16.mxu0 %v460
        %542 = vmatpush2.bf16.msra.mxu0 %v459
        %543 = vmatprep.subr.bf16.mxu0 %v458
        %544 = vmatpush2.bf16.msra.mxu0 %v457
        %545 = vmatprep.subr.bf16.mxu0 %v456
        %546 = vmatpush2.bf16.msra.mxu0 %v455
        %547 = vmatprep.subr.bf16.mxu0 %v454
        %548 = vmatpush2.bf16.msra.mxu0 %v453
        %549 = vmatprep.subr.bf16.mxu0 %v452
        %550 = vmatpush2.bf16.msra.mxu0 %v451
        %551 = vmatprep.subr.bf16.mxu0 %v450
        %552 = vmatpush2.bf16.msra.mxu0 %v449
        %553 = vmatprep.subr.bf16.mxu0 %v448
        %554 = vmatpush2.bf16.msra.mxu0 %v447
        %555 = vmatprep.subr.bf16.mxu0 %v446
        %556 = vmatpush2.bf16.msra.mxu0 %v445
        %557 = vmatprep.mubr.bf16.mxu0 %v214
        %558 = vmatmul.mubr.bf16.gmra.mxu0 %v213
        %v559 = vpop.f32.mrf.mxu0
        %v560 = vadd.f32 0.0, %v559
        %v561 = vpop.f32.mrf.mxu0
        %v562 = vadd.f32 0.0, %v561
        %v563 = vpop.f32.mrf.mxu0
        %v564 = vadd.f32 0.0, %v563
        %v565 = vpop.f32.mrf.mxu0
        %v566 = vadd.f32 0.0, %v565
        %567 = vmatprep.mubr.bf16.mxu0 %v217
        %568 = vmatmul.mubr.bf16.gmra.mxu0 %v216
        %v569 = vpop.f32.mrf.mxu0
        %v570 = vadd.f32 0.0, %v569
        %v571 = vpop.f32.mrf.mxu0
        %v572 = vadd.f32 0.0, %v571
        %v573 = vpop.f32.mrf.mxu0
        %v574 = vadd.f32 0.0, %v573
        %v575 = vpop.f32.mrf.mxu0
        %v576 = vadd.f32 0.0, %v575
        %577 = vmatprep.mubr.bf16.mxu0 %v220
        %578 = vmatmul.mubr.bf16.gmra.mxu0 %v219
        %v579 = vpop.f32.mrf.mxu0
        %v580 = vadd.f32 0.0, %v579
        %v581 = vpop.f32.mrf.mxu0
        %v582 = vadd.f32 0.0, %v581
        %v583 = vpop.f32.mrf.mxu0
        %v584 = vadd.f32 0.0, %v583
        %v585 = vpop.f32.mrf.mxu0
        %v586 = vadd.f32 0.0, %v585
        %587 = vmatprep.mubr.bf16.mxu0 %v223
        %588 = vmatmul.mubr.bf16.gmra.mxu0 %v222
        %v589 = vpop.f32.mrf.mxu0
        %v590 = vadd.f32 0.0, %v589
        %v591 = vpop.f32.mrf.mxu0
        %v592 = vadd.f32 0.0, %v591
        %v593 = vpop.f32.mrf.mxu0
        %v594 = vadd.f32 0.0, %v593
        %v595 = vpop.f32.mrf.mxu0
        %v596 = vadd.f32 0.0, %v595
        %597 = vmatprep.mubr.bf16.mxu0 %v226
        %598 = vmatmul.mubr.bf16.gmra.mxu0 %v225
        %v599 = vpop.f32.mrf.mxu0
        %v600 = vadd.f32 0.0, %v599
        %v601 = vpop.f32.mrf.mxu0
        %v602 = vadd.f32 0.0, %v601
        %v603 = vpop.f32.mrf.mxu0
        %v604 = vadd.f32 0.0, %v603
        %v605 = vpop.f32.mrf.mxu0
        %v606 = vadd.f32 0.0, %v605
        %607 = vmatprep.mubr.bf16.mxu0 %v229
        %608 = vmatmul.mubr.bf16.gmra.mxu0 %v228
        %v609 = vpop.f32.mrf.mxu0
        %v610 = vadd.f32 0.0, %v609
        %v611 = vpop.f32.mrf.mxu0
        %v612 = vadd.f32 0.0, %v611
        %v613 = vpop.f32.mrf.mxu0
        %v614 = vadd.f32 0.0, %v613
        %v615 = vpop.f32.mrf.mxu0
        %v616 = vadd.f32 0.0, %v615
        %617 = vmatprep.mubr.bf16.mxu0 %v232
        %618 = vmatmul.mubr.bf16.gmra.mxu0 %v231
        %v619 = vpop.f32.mrf.mxu0
        %v620 = vadd.f32 0.0, %v619
        %v621 = vpop.f32.mrf.mxu0
        %v622 = vadd.f32 0.0, %v621
        %v623 = vpop.f32.mrf.mxu0
        %v624 = vadd.f32 0.0, %v623
        %v625 = vpop.f32.mrf.mxu0
        %v626 = vadd.f32 0.0, %v625
        %627 = vmatprep.mubr.bf16.mxu0 %v235
        %628 = vmatmul.mubr.bf16.gmra.mxu0 %v234
        %v629 = vpop.f32.mrf.mxu0
        %v630 = vadd.f32 0.0, %v629
        %v631 = vpop.f32.mrf.mxu0
        %v632 = vadd.f32 0.0, %v631
        %v633 = vpop.f32.mrf.mxu0
        %v634 = vadd.f32 0.0, %v633
        %v635 = vpop.f32.mrf.mxu0
        %v636 = vadd.f32 0.0, %v635
        %637 = vdwg.mxu0
        %638 = vmatprep.subr.bf16.mxu0 %v476
        %639 = vmatpush1.bf16.msra.mxu0 %v475
        %640 = vmatprep.subr.bf16.mxu0 %v474
        %641 = vmatpush1.bf16.msra.mxu0 %v473
        %642 = vmatprep.subr.bf16.mxu0 %v472
        %643 = vmatpush1.bf16.msra.mxu0 %v471
        %644 = vmatprep.subr.bf16.mxu0 %v470
        %645 = vmatpush1.bf16.msra.mxu0 %v469
        %646 = vmatprep.subr.bf16.mxu0 %v468
        %647 = vmatpush1.bf16.msra.mxu0 %v467
        %648 = vmatprep.subr.bf16.mxu0 %v466
        %649 = vmatpush1.bf16.msra.mxu0 %v465
        %650 = vmatprep.subr.bf16.mxu0 %v464
        %651 = vmatpush1.bf16.msra.mxu0 %v463
        %652 = vmatprep.subr.bf16.mxu0 %v462
        %653 = vmatpush1.bf16.msra.mxu0 %v461
        %654 = vmatprep.subr.bf16.mxu0 0
        %655 = vmatpush2.bf16.msra.mxu0 0
        %656 = vmatprep.subr.bf16.mxu0 0
        %657 = vmatpush2.bf16.msra.mxu0 0
        %658 = vmatprep.subr.bf16.mxu0 0
        %659 = vmatpush2.bf16.msra.mxu0 0
        %660 = vmatprep.subr.bf16.mxu0 0
        %661 = vmatpush2.bf16.msra.mxu0 0
        %662 = vmatprep.subr.bf16.mxu0 0
        %663 = vmatpush2.bf16.msra.mxu0 0
        %664 = vmatprep.subr.bf16.mxu0 0
        %665 = vmatpush2.bf16.msra.mxu0 0
        %666 = vmatprep.subr.bf16.mxu0 0
        %667 = vmatpush2.bf16.msra.mxu0 0
        %668 = vmatprep.subr.bf16.mxu0 0
        %669 = vmatpush2.bf16.msra.mxu0 0
        %670 = vmatprep.mubr.bf16.mxu0 0
        %671 = vmatmul.mubr.bf16.gmra.mxu0 %v215
        %v672 = vpop.f32.mrf.mxu0
        %v673 = vadd.f32 %v560, %v672
        %v674 = vpop.f32.mrf.mxu0
        %v675 = vadd.f32 %v562, %v674
        %v676 = vpop.f32.mrf.mxu0
        %v677 = vadd.f32 %v564, %v676
        %v678 = vpop.f32.mrf.mxu0
        %v679 = vadd.f32 %v566, %v678
        %680 = vmatprep.mubr.bf16.mxu0 0
        %681 = vmatmul.mubr.bf16.gmra.mxu0 %v218
        %v682 = vpop.f32.mrf.mxu0
        %v683 = vadd.f32 %v570, %v682
        %v684 = vpop.f32.mrf.mxu0
        %v685 = vadd.f32 %v572, %v684
        %v686 = vpop.f32.mrf.mxu0
        %v687 = vadd.f32 %v574, %v686
        %v688 = vpop.f32.mrf.mxu0
        %v689 = vadd.f32 %v576, %v688
        %690 = vmatprep.mubr.bf16.mxu0 0
        %691 = vmatmul.mubr.bf16.gmra.mxu0 %v221
        %v692 = vpop.f32.mrf.mxu0
        %v693 = vadd.f32 %v580, %v692
        %v694 = vpop.f32.mrf.mxu0
        %v695 = vadd.f32 %v582, %v694
        %v696 = vpop.f32.mrf.mxu0
        %v697 = vadd.f32 %v584, %v696
        %v698 = vpop.f32.mrf.mxu0
        %v699 = vadd.f32 %v586, %v698
        %700 = vmatprep.mubr.bf16.mxu0 0
        %701 = vmatmul.mubr.bf16.gmra.mxu0 %v224
        %v702 = vpop.f32.mrf.mxu0
        %v703 = vadd.f32 %v590, %v702
        %v704 = vpop.f32.mrf.mxu0
        %v705 = vadd.f32 %v592, %v704
        %v706 = vpop.f32.mrf.mxu0
        %v707 = vadd.f32 %v594, %v706
        %v708 = vpop.f32.mrf.mxu0
        %v709 = vadd.f32 %v596, %v708
        %710 = vmatprep.mubr.bf16.mxu0 0
        %711 = vmatmul.mubr.bf16.gmra.mxu0 %v227
        %v712 = vpop.f32.mrf.mxu0
        %v713 = vadd.f32 %v600, %v712
        %v714 = vpop.f32.mrf.mxu0
        %v715 = vadd.f32 %v602, %v714
        %v716 = vpop.f32.mrf.mxu0
        %v717 = vadd.f32 %v604, %v716
        %v718 = vpop.f32.mrf.mxu0
        %v719 = vadd.f32 %v606, %v718
        %720 = vmatprep.mubr.bf16.mxu0 0
        %721 = vmatmul.mubr.bf16.gmra.mxu0 %v230
        %v722 = vpop.f32.mrf.mxu0
        %v723 = vadd.f32 %v610, %v722
        %v724 = vpop.f32.mrf.mxu0
        %v725 = vadd.f32 %v612, %v724
        %v726 = vpop.f32.mrf.mxu0
        %v727 = vadd.f32 %v614, %v726
        %v728 = vpop.f32.mrf.mxu0
        %v729 = vadd.f32 %v616, %v728
        %730 = vmatprep.mubr.bf16.mxu0 0
        %731 = vmatmul.mubr.bf16.gmra.mxu0 %v233
        %v732 = vpop.f32.mrf.mxu0
        %v733 = vadd.f32 %v620, %v732
        %v734 = vpop.f32.mrf.mxu0
        %v735 = vadd.f32 %v622, %v734
        %v736 = vpop.f32.mrf.mxu0
        %v737 = vadd.f32 %v624, %v736
        %v738 = vpop.f32.mrf.mxu0
        %v739 = vadd.f32 %v626, %v738
        %740 = vmatprep.mubr.bf16.mxu0 0
        %741 = vmatmul.mubr.bf16.gmra.mxu0 %v236
        %v742 = vpop.f32.mrf.mxu0
        %v743 = vadd.f32 %v630, %v742
        %v744 = vpop.f32.mrf.mxu0
        %v745 = vadd.f32 %v632, %v744
        %v746 = vpop.f32.mrf.mxu0
        %v747 = vadd.f32 %v634, %v746
        %v748 = vpop.f32.mrf.mxu0
        %v749 = vadd.f32 %v636, %v748
        %750 = vdwg.mxu0
        %v751 = vpack.c.bf16 %v677, %v673
        %v752 = vpack.c.bf16 %v687, %v683
        %v753 = vpack.c.bf16 %v697, %v693
        %v754 = vpack.c.bf16 %v707, %v703
        %v755 = vpack.c.bf16 %v717, %v713
        %v756 = vpack.c.bf16 %v727, %v723
        %v757 = vpack.c.bf16 %v737, %v733
        %v758 = vpack.c.bf16 %v747, %v743
        %767 = vrot.lane.b32.xlu0 %v751, 64
        %v768 = vpop.permute.xlu0 %767
        %769 = vrot.lane.b32.xlu0 %v752, 64
        %v770 = vpop.permute.xlu0 %769
        %771 = vrot.lane.b32.xlu0 %v753, 64
        %v772 = vpop.permute.xlu0 %771
        %773 = vrot.lane.b32.xlu0 %v754, 64
        %v774 = vpop.permute.xlu0 %773
        %775 = vrot.lane.b32.xlu0 %v755, 64
        %v776 = vpop.permute.xlu0 %775
        %777 = vrot.lane.b32.xlu0 %v756, 64
        %v778 = vpop.permute.xlu0 %777
        %779 = vrot.lane.b32.xlu0 %v757, 64
        %v780 = vpop.permute.xlu0 %779
        %781 = vrot.lane.b32.xlu0 %v758, 64
        %v782 = vpop.permute.xlu0 %781
        %vm783 = vcmask 523264
        %v785 = vsel %vm783, %v768, 0
        %v788 = vsel %vm783, %v770, 0
        %v791 = vsel %vm783, %v772, 0
        %v794 = vsel %vm783, %v774, 0
        %v797 = vsel %vm783, %v776, 0
        %v800 = vsel %vm783, %v778, 0
        %v803 = vsel %vm783, %v780, 0
        %v806 = vsel %vm783, %v782, 0
        %v809 = vsel %vm783, %v751, 0
        %v812 = vsel %vm783, %v752, 0
        %v815 = vsel %vm783, %v753, 0
        %v818 = vsel %vm783, %v754, 0
        %v821 = vsel %vm783, %v755, 0
        %v824 = vsel %vm783, %v756, 0
        %v827 = vsel %vm783, %v757, 0
        %v830 = vsel %vm783, %v758, 0
        %832 = vmatprep.subr.bf16.mxu0 0
        %833 = vmatpush1.bf16.xpose.msra.mxu0 %v830
        %834 = vmatprep.subr.bf16.mxu0 0
        %835 = vmatpush1.bf16.xpose.msra.mxu0 %v827
        %836 = vmatprep.subr.bf16.mxu0 0
        %837 = vmatpush1.bf16.xpose.msra.mxu0 %v824
        %838 = vmatprep.subr.bf16.mxu0 0
        %839 = vmatpush1.bf16.xpose.msra.mxu0 %v821
        %840 = vmatprep.subr.bf16.mxu0 0
        %841 = vmatpush1.bf16.xpose.msra.mxu0 %v818
        %842 = vmatprep.subr.bf16.mxu0 0
        %843 = vmatpush1.bf16.xpose.msra.mxu0 %v815
        %844 = vmatprep.subr.bf16.mxu0 0
        %845 = vmatpush1.bf16.xpose.msra.mxu0 %v812
        %846 = vmatprep.subr.bf16.mxu0 0
        %847 = vmatpush1.bf16.xpose.msra.mxu0 %v809
        %848 = vmatprep.subr.bf16.mxu0 0
        %849 = vmatpush2.bf16.xpose.msra.mxu0 0
        %850 = vmatprep.subr.bf16.mxu0 0
        %851 = vmatpush2.bf16.xpose.msra.mxu0 0
        %852 = vmatprep.subr.bf16.mxu0 0
        %853 = vmatpush2.bf16.xpose.msra.mxu0 0
        %854 = vmatprep.subr.bf16.mxu0 0
        %855 = vmatpush2.bf16.xpose.msra.mxu0 0
        %856 = vmatprep.subr.bf16.mxu0 0
        %857 = vmatpush2.bf16.xpose.msra.mxu0 0
        %858 = vmatprep.subr.bf16.mxu0 0
        %859 = vmatpush2.bf16.xpose.msra.mxu0 0
        %860 = vmatprep.subr.bf16.mxu0 0
        %861 = vmatpush2.bf16.xpose.msra.mxu0 0
        %862 = vmatprep.subr.bf16.mxu0 0
        %863 = vmatpush2.bf16.xpose.msra.mxu0 0
        %864 = vmatprep.mubr.bf16.mxu0 0
        %865 = vmatmul.mubr.bf16.gmra.mxu0 %v785
        %v866 = vpop.f32.mrf.mxu0
        %v867 = vadd.f32 0.0, %v866
        %v868 = vpop.f32.mrf.mxu0
        %v869 = vpop.f32.mrf.mxu0
        %v870 = vadd.f32 0.0, %v869
        %v871 = vpop.f32.mrf.mxu0
        %872 = vmatprep.mubr.bf16.mxu0 0
        %873 = vmatmul.mubr.bf16.gmra.mxu0 %v788
        %v874 = vpop.f32.mrf.mxu0
        %v875 = vadd.f32 0.0, %v874
        %v876 = vpop.f32.mrf.mxu0
        %v877 = vpop.f32.mrf.mxu0
        %v878 = vadd.f32 0.0, %v877
        %v879 = vpop.f32.mrf.mxu0
        %880 = vmatprep.mubr.bf16.mxu0 0
        %881 = vmatmul.mubr.bf16.gmra.mxu0 %v791
        %v882 = vpop.f32.mrf.mxu0
        %v883 = vadd.f32 0.0, %v882
        %v884 = vpop.f32.mrf.mxu0
        %v885 = vpop.f32.mrf.mxu0
        %v886 = vadd.f32 0.0, %v885
        %v887 = vpop.f32.mrf.mxu0
        %888 = vmatprep.mubr.bf16.mxu0 0
        %889 = vmatmul.mubr.bf16.gmra.mxu0 %v794
        %v890 = vpop.f32.mrf.mxu0
        %v891 = vadd.f32 0.0, %v890
        %v892 = vpop.f32.mrf.mxu0
        %v893 = vpop.f32.mrf.mxu0
        %v894 = vadd.f32 0.0, %v893
        %v895 = vpop.f32.mrf.mxu0
        %896 = vmatprep.mubr.bf16.mxu0 0
        %897 = vmatmul.mubr.bf16.gmra.mxu0 %v797
        %v898 = vpop.f32.mrf.mxu0
        %v899 = vadd.f32 0.0, %v898
        %v900 = vpop.f32.mrf.mxu0
        %v901 = vpop.f32.mrf.mxu0
        %v902 = vadd.f32 0.0, %v901
        %v903 = vpop.f32.mrf.mxu0
        %904 = vmatprep.mubr.bf16.mxu0 0
        %905 = vmatmul.mubr.bf16.gmra.mxu0 %v800
        %v906 = vpop.f32.mrf.mxu0
        %v907 = vadd.f32 0.0, %v906
        %v908 = vpop.f32.mrf.mxu0
        %v909 = vpop.f32.mrf.mxu0
        %v910 = vadd.f32 0.0, %v909
        %v911 = vpop.f32.mrf.mxu0
        %912 = vmatprep.mubr.bf16.mxu0 0
        %913 = vmatmul.mubr.bf16.gmra.mxu0 %v803
        %v914 = vpop.f32.mrf.mxu0
        %v915 = vadd.f32 0.0, %v914
        %v916 = vpop.f32.mrf.mxu0
        %v917 = vpop.f32.mrf.mxu0
        %v918 = vadd.f32 0.0, %v917
        %v919 = vpop.f32.mrf.mxu0
        %920 = vmatprep.mubr.bf16.mxu0 0
        %921 = vmatmul.mubr.bf16.gmra.mxu0 %v806
        %v922 = vpop.f32.mrf.mxu0
        %v923 = vadd.f32 0.0, %v922
        %v924 = vpop.f32.mrf.mxu0
        %v925 = vpop.f32.mrf.mxu0
        %v926 = vadd.f32 0.0, %v925
        %v927 = vpop.f32.mrf.mxu0
        %928 = vdwg.mxu0
        %v929 = vlaneseq
        %v930 = vshrl.u32 %v929, 7
        %v931 = vadd.s32 %v930, 8
        %v932 = vadd.s32 %v930, 16
        %v933 = vadd.s32 %v930, 24
        %v934 = vadd.s32 %v930, 32
        %v935 = vadd.s32 %v930, 40
        %v936 = vadd.s32 %v930, 48
        %v937 = vadd.s32 %v930, 56
        %v938 = vadd.s32 %v930, 64
        %v939 = vadd.s32 %v930, 72
        %v940 = vadd.s32 %v930, 80
        %v941 = vadd.s32 %v930, 88
        %v942 = vadd.s32 %v930, 96
        %v943 = vadd.s32 %v930, 104
        %v944 = vadd.s32 %v930, 112
        %v945 = vadd.s32 %v930, 120
        %v946 = vlaneseq
        %v947 = vand.u32 %v946, 127
        %vm948 = vcmp.le.s32.totalorder %v947, %v930
        %vm949 = vcmp.le.s32.totalorder %v947, %v931
        %vm950 = vcmp.le.s32.totalorder %v947, %v932
        %vm951 = vcmp.le.s32.totalorder %v947, %v933
        %vm952 = vcmp.le.s32.totalorder %v947, %v934
        %vm953 = vcmp.le.s32.totalorder %v947, %v935
        %vm954 = vcmp.le.s32.totalorder %v947, %v936
        %vm955 = vcmp.le.s32.totalorder %v947, %v937
        %vm956 = vcmp.le.s32.totalorder %v947, %v938
        %vm957 = vcmp.le.s32.totalorder %v947, %v939
        %vm958 = vcmp.le.s32.totalorder %v947, %v940
        %vm959 = vcmp.le.s32.totalorder %v947, %v941
        %vm960 = vcmp.le.s32.totalorder %v947, %v942
        %vm961 = vcmp.le.s32.totalorder %v947, %v943
        %vm962 = vcmp.le.s32.totalorder %v947, %v944
        %vm963 = vcmp.le.s32.totalorder %v947, %v945
        %v964 = vsel %vm948, %v867, -1e+30
        %v965 = vsel %vm949, %v870, -1e+30
        %v966 = vsel %vm950, %v875, -1e+30
        %v967 = vsel %vm951, %v878, -1e+30
        %v968 = vsel %vm952, %v883, -1e+30
        %v969 = vsel %vm953, %v886, -1e+30
        %v970 = vsel %vm954, %v891, -1e+30
        %v971 = vsel %vm955, %v894, -1e+30
        %v972 = vsel %vm956, %v899, -1e+30
        %v973 = vsel %vm957, %v902, -1e+30
        %v974 = vsel %vm958, %v907, -1e+30
        %v975 = vsel %vm959, %v910, -1e+30
        %v976 = vsel %vm960, %v915, -1e+30
        %v977 = vsel %vm961, %v918, -1e+30
        %v978 = vsel %vm962, %v923, -1e+30
        %v979 = vsel %vm963, %v926, -1e+30
        %980 = vmax.xlane.f32.xlu0 %v964
        %v981 = vpop.xlane.xlu0 %980
        %982 = vmax.xlane.f32.xlu0 %v965
        %v983 = vpop.xlane.xlu0 %982
        %984 = vmax.xlane.f32.xlu0 %v966
        %v985 = vpop.xlane.xlu0 %984
        %986 = vmax.xlane.f32.xlu0 %v967
        %v987 = vpop.xlane.xlu0 %986
        %988 = vmax.xlane.f32.xlu0 %v968
        %v989 = vpop.xlane.xlu0 %988
        %990 = vmax.xlane.f32.xlu0 %v969
        %v991 = vpop.xlane.xlu0 %990
        %992 = vmax.xlane.f32.xlu0 %v970
        %v993 = vpop.xlane.xlu0 %992
        %994 = vmax.xlane.f32.xlu0 %v971
        %v995 = vpop.xlane.xlu0 %994
        %996 = vmax.xlane.f32.xlu0 %v972
        %v997 = vpop.xlane.xlu0 %996
        %998 = vmax.xlane.f32.xlu0 %v973
        %v999 = vpop.xlane.xlu0 %998
        %1000 = vmax.xlane.f32.xlu0 %v974
        %v1001 = vpop.xlane.xlu0 %1000
        %1002 = vmax.xlane.f32.xlu0 %v975
        %v1003 = vpop.xlane.xlu0 %1002
        %1004 = vmax.xlane.f32.xlu0 %v976
        %v1005 = vpop.xlane.xlu0 %1004
        %1006 = vmax.xlane.f32.xlu0 %v977
        %v1007 = vpop.xlane.xlu0 %1006
        %1008 = vmax.xlane.f32.xlu0 %v978
        %v1009 = vpop.xlane.xlu0 %1008
        %1010 = vmax.xlane.f32.xlu0 %v979
        %v1011 = vpop.xlane.xlu0 %1010
        %v1012 = vsub.f32 %v964, %v981
        %v1013 = vsub.f32 %v965, %v983
        %v1014 = vsub.f32 %v966, %v985
        %v1015 = vsub.f32 %v967, %v987
        %v1016 = vsub.f32 %v968, %v989
        %v1017 = vsub.f32 %v969, %v991
        %v1018 = vsub.f32 %v970, %v993
        %v1019 = vsub.f32 %v971, %v995
        %v1020 = vsub.f32 %v972, %v997
        %v1021 = vsub.f32 %v973, %v999
        %v1022 = vsub.f32 %v974, %v1001
        %v1023 = vsub.f32 %v975, %v1003
        %v1024 = vsub.f32 %v976, %v1005
        %v1025 = vsub.f32 %v977, %v1007
        %v1026 = vsub.f32 %v978, %v1009
        %v1027 = vsub.f32 %v979, %v1011
        %v1028 = vmul.f32 %v1012, 1.442695
        %v1029 = vpow.pop %v1028
        %v1030 = vmul.f32 %v1013, 1.442695
        %v1031 = vpow.pop %v1030
        %v1032 = vmul.f32 %v1014, 1.442695
        %v1033 = vpow.pop %v1032
        %v1034 = vmul.f32 %v1015, 1.442695
        %v1035 = vpow.pop %v1034
        %v1036 = vmul.f32 %v1016, 1.442695
        %v1037 = vpow.pop %v1036
        %v1038 = vmul.f32 %v1017, 1.442695
        %v1039 = vpow.pop %v1038
        %v1040 = vmul.f32 %v1018, 1.442695
        %v1041 = vpow.pop %v1040
        %v1042 = vmul.f32 %v1019, 1.442695
        %v1043 = vpow.pop %v1042
        %v1044 = vmul.f32 %v1020, 1.442695
        %v1045 = vpow.pop %v1044
        %v1046 = vmul.f32 %v1021, 1.442695
        %v1047 = vpow.pop %v1046
        %v1048 = vmul.f32 %v1022, 1.442695
        %v1049 = vpow.pop %v1048
        %v1050 = vmul.f32 %v1023, 1.442695
        %v1051 = vpow.pop %v1050
        %v1052 = vmul.f32 %v1024, 1.442695
        %v1053 = vpow.pop %v1052
        %v1054 = vmul.f32 %v1025, 1.442695
        %v1055 = vpow.pop %v1054
        %v1056 = vmul.f32 %v1026, 1.442695
        %v1057 = vpow.pop %v1056
        %v1058 = vmul.f32 %v1027, 1.442695
        %v1059 = vpow.pop %v1058
        %1060 = vadd.xlane.f32.xlu0 %v1029
        %v1061 = vpop.xlane.xlu0 %1060
        %1062 = vadd.xlane.f32.xlu0 %v1031
        %v1063 = vpop.xlane.xlu0 %1062
        %1064 = vadd.xlane.f32.xlu0 %v1033
        %v1065 = vpop.xlane.xlu0 %1064
        %1066 = vadd.xlane.f32.xlu0 %v1035
        %v1067 = vpop.xlane.xlu0 %1066
        %1068 = vadd.xlane.f32.xlu0 %v1037
        %v1069 = vpop.xlane.xlu0 %1068
        %1070 = vadd.xlane.f32.xlu0 %v1039
        %v1071 = vpop.xlane.xlu0 %1070
        %1072 = vadd.xlane.f32.xlu0 %v1041
        %v1073 = vpop.xlane.xlu0 %1072
        %1074 = vadd.xlane.f32.xlu0 %v1043
        %v1075 = vpop.xlane.xlu0 %1074
        %1076 = vadd.xlane.f32.xlu0 %v1045
        %v1077 = vpop.xlane.xlu0 %1076
        %1078 = vadd.xlane.f32.xlu0 %v1047
        %v1079 = vpop.xlane.xlu0 %1078
        %1080 = vadd.xlane.f32.xlu0 %v1049
        %v1081 = vpop.xlane.xlu0 %1080
        %1082 = vadd.xlane.f32.xlu0 %v1051
        %v1083 = vpop.xlane.xlu0 %1082
        %1084 = vadd.xlane.f32.xlu0 %v1053
        %v1085 = vpop.xlane.xlu0 %1084
        %1086 = vadd.xlane.f32.xlu0 %v1055
        %v1087 = vpop.xlane.xlu0 %1086
        %1088 = vadd.xlane.f32.xlu0 %v1057
        %v1089 = vpop.xlane.xlu0 %1088
        %1090 = vadd.xlane.f32.xlu0 %v1059
        %v1091 = vpop.xlane.xlu0 %1090
        %v1092 = vpack.c.bf16 %v1031, %v1029
        %v1093 = vpack.c.bf16 %v1035, %v1033
        %v1094 = vpack.c.bf16 %v1039, %v1037
        %v1095 = vpack.c.bf16 %v1043, %v1041
        %v1096 = vpack.c.bf16 %v1047, %v1045
        %v1097 = vpack.c.bf16 %v1051, %v1049
        %v1098 = vpack.c.bf16 %v1055, %v1053
        %v1099 = vpack.c.bf16 %v1059, %v1057
        %v1100 = vpack.c.bf16 %v679, %v675
        %v1101 = vpack.c.bf16 %v689, %v685
        %v1102 = vpack.c.bf16 %v699, %v695
        %v1103 = vpack.c.bf16 %v709, %v705
        %v1104 = vpack.c.bf16 %v719, %v715
        %v1105 = vpack.c.bf16 %v729, %v725
        %v1106 = vpack.c.bf16 %v739, %v735
        %v1107 = vpack.c.bf16 %v749, %v745
        %1108 = vmatprep.subr.bf16.mxu0 0
        %1109 = vmatpush1.bf16.msra.mxu0 %v1107
        %1110 = vmatprep.subr.bf16.mxu0 0
        %1111 = vmatpush1.bf16.msra.mxu0 %v1106
        %1112 = vmatprep.subr.bf16.mxu0 0
        %1113 = vmatpush1.bf16.msra.mxu0 %v1105
        %1114 = vmatprep.subr.bf16.mxu0 0
        %1115 = vmatpush1.bf16.msra.mxu0 %v1104
        %1116 = vmatprep.subr.bf16.mxu0 0
        %1117 = vmatpush1.bf16.msra.mxu0 %v1103
        %1118 = vmatprep.subr.bf16.mxu0 0
        %1119 = vmatpush1.bf16.msra.mxu0 %v1102
        %1120 = vmatprep.subr.bf16.mxu0 0
        %1121 = vmatpush1.bf16.msra.mxu0 %v1101
        %1122 = vmatprep.subr.bf16.mxu0 0
        %1123 = vmatpush1.bf16.msra.mxu0 %v1100
        %1124 = vmatprep.subr.bf16.mxu0 0
        %1125 = vmatpush2.bf16.msra.mxu0 0
        %1126 = vmatprep.subr.bf16.mxu0 0
        %1127 = vmatpush2.bf16.msra.mxu0 0
        %1128 = vmatprep.subr.bf16.mxu0 0
        %1129 = vmatpush2.bf16.msra.mxu0 0
        %1130 = vmatprep.subr.bf16.mxu0 0
        %1131 = vmatpush2.bf16.msra.mxu0 0
        %1132 = vmatprep.subr.bf16.mxu0 0
        %1133 = vmatpush2.bf16.msra.mxu0 0
        %1134 = vmatprep.subr.bf16.mxu0 0
        %1135 = vmatpush2.bf16.msra.mxu0 0
        %1136 = vmatprep.subr.bf16.mxu0 0
        %1137 = vmatpush2.bf16.msra.mxu0 0
        %1138 = vmatprep.subr.bf16.mxu0 0
        %1139 = vmatpush2.bf16.msra.mxu0 0
        %1140 = vmatprep.mubr.bf16.mxu0 0
        %1141 = vmatmul.mubr.bf16.gmra.mxu0 %v1092
        %v1142 = vpop.f32.mrf.mxu0
        %v1143 = vadd.f32 0.0, %v1142
        %v1144 = vpop.f32.mrf.mxu0
        %v1145 = vpop.f32.mrf.mxu0
        %v1146 = vadd.f32 0.0, %v1145
        %v1147 = vpop.f32.mrf.mxu0
        %1148 = vmatprep.mubr.bf16.mxu0 0
        %1149 = vmatmul.mubr.bf16.gmra.mxu0 %v1093
        %v1150 = vpop.f32.mrf.mxu0
        %v1151 = vadd.f32 0.0, %v1150
        %v1152 = vpop.f32.mrf.mxu0
        %v1153 = vpop.f32.mrf.mxu0
        %v1154 = vadd.f32 0.0, %v1153
        %v1155 = vpop.f32.mrf.mxu0
        %1156 = vmatprep.mubr.bf16.mxu0 0
        %1157 = vmatmul.mubr.bf16.gmra.mxu0 %v1094
        %v1158 = vpop.f32.mrf.mxu0
        %v1159 = vadd.f32 0.0, %v1158
        %v1160 = vpop.f32.mrf.mxu0
        %v1161 = vpop.f32.mrf.mxu0
        %v1162 = vadd.f32 0.0, %v1161
        %v1163 = vpop.f32.mrf.mxu0
        %1164 = vmatprep.mubr.bf16.mxu0 0
        %1165 = vmatmul.mubr.bf16.gmra.mxu0 %v1095
        %v1166 = vpop.f32.mrf.mxu0
        %v1167 = vadd.f32 0.0, %v1166
        %v1168 = vpop.f32.mrf.mxu0
        %v1169 = vpop.f32.mrf.mxu0
        %v1170 = vadd.f32 0.0, %v1169
        %v1171 = vpop.f32.mrf.mxu0
        %1172 = vmatprep.mubr.bf16.mxu0 0
        %1173 = vmatmul.mubr.bf16.gmra.mxu0 %v1096
        %v1174 = vpop.f32.mrf.mxu0
        %v1175 = vadd.f32 0.0, %v1174
        %v1176 = vpop.f32.mrf.mxu0
        %v1177 = vpop.f32.mrf.mxu0
        %v1178 = vadd.f32 0.0, %v1177
        %v1179 = vpop.f32.mrf.mxu0
        %1180 = vmatprep.mubr.bf16.mxu0 0
        %1181 = vmatmul.mubr.bf16.gmra.mxu0 %v1097
        %v1182 = vpop.f32.mrf.mxu0
        %v1183 = vadd.f32 0.0, %v1182
        %v1184 = vpop.f32.mrf.mxu0
        %v1185 = vpop.f32.mrf.mxu0
        %v1186 = vadd.f32 0.0, %v1185
        %v1187 = vpop.f32.mrf.mxu0
        %1188 = vmatprep.mubr.bf16.mxu0 0
        %1189 = vmatmul.mubr.bf16.gmra.mxu0 %v1098
        %v1190 = vpop.f32.mrf.mxu0
        %v1191 = vadd.f32 0.0, %v1190
        %v1192 = vpop.f32.mrf.mxu0
        %v1193 = vpop.f32.mrf.mxu0
        %v1194 = vadd.f32 0.0, %v1193
        %v1195 = vpop.f32.mrf.mxu0
        %1196 = vmatprep.mubr.bf16.mxu0 0
        %1197 = vmatmul.mubr.bf16.gmra.mxu0 %v1099
        %v1198 = vpop.f32.mrf.mxu0
        %v1199 = vadd.f32 0.0, %v1198
        %v1200 = vpop.f32.mrf.mxu0
        %v1201 = vpop.f32.mrf.mxu0
        %v1202 = vadd.f32 0.0, %v1201
        %v1203 = vpop.f32.mrf.mxu0
        %1204 = vdwg.mxu0
        %v1205 = vrcp.pop %v1061
        %v1206 = vrcp.pop %v1063
        %v1207 = vrcp.pop %v1065
        %v1208 = vrcp.pop %v1067
        %v1209 = vrcp.pop %v1069
        %v1210 = vrcp.pop %v1071
        %v1211 = vrcp.pop %v1073
        %v1212 = vrcp.pop %v1075
        %v1213 = vrcp.pop %v1077
        %v1214 = vrcp.pop %v1079
        %v1215 = vrcp.pop %v1081
        %v1216 = vrcp.pop %v1083
        %v1217 = vrcp.pop %v1085
        %v1218 = vrcp.pop %v1087
        %v1219 = vrcp.pop %v1089
        %v1220 = vrcp.pop %v1091
        %v1221 = vmul.f32 %v1143, %v1205
        %v1222 = vmul.f32 %v1146, %v1206
        %v1223 = vmul.f32 %v1151, %v1207
        %v1224 = vmul.f32 %v1154, %v1208
        %v1225 = vmul.f32 %v1159, %v1209
        %v1226 = vmul.f32 %v1162, %v1210
        %v1227 = vmul.f32 %v1167, %v1211
        %v1228 = vmul.f32 %v1170, %v1212
        %v1229 = vmul.f32 %v1175, %v1213
        %v1230 = vmul.f32 %v1178, %v1214
        %v1231 = vmul.f32 %v1183, %v1215
        %v1232 = vmul.f32 %v1186, %v1216
        %v1233 = vmul.f32 %v1191, %v1217
        %v1234 = vmul.f32 %v1194, %v1218
        %v1235 = vmul.f32 %v1199, %v1219
        %v1236 = vmul.f32 %v1202, %v1220
        %1237 = vst.msk [vmem:[%s163] sm:$0xff] %vm783, %v1221
        %1238 = vst.msk [vmem:[%s163 + $0x8] sm:$0xff] %vm783, %v1222
        %1239 = vst.msk [vmem:[%s163 + $0x10] sm:$0xff] %vm783, %v1223
        %1240 = vst.msk [vmem:[%s163 + $0x18] sm:$0xff] %vm783, %v1224
        %1241 = vst.msk [vmem:[%s163 + $0x20] sm:$0xff] %vm783, %v1225
        %1242 = vst.msk [vmem:[%s163 + $0x28] sm:$0xff] %vm783, %v1226
        %1243 = vst.msk [vmem:[%s163 + $0x30] sm:$0xff] %vm783, %v1227
        %1244 = vst.msk [vmem:[%s163 + $0x38] sm:$0xff] %vm783, %v1228
        %1245 = vst.msk [vmem:[%s163 + $0x40] sm:$0xff] %vm783, %v1229
        %1246 = vst.msk [vmem:[%s163 + $0x48] sm:$0xff] %vm783, %v1230
        %1247 = vst.msk [vmem:[%s163 + $0x50] sm:$0xff] %vm783, %v1231
        %1248 = vst.msk [vmem:[%s163 + $0x58] sm:$0xff] %vm783, %v1232
        %1249 = vst.msk [vmem:[%s163 + $0x60] sm:$0xff] %vm783, %v1233
        %1250 = vst.msk [vmem:[%s163 + $0x68] sm:$0xff] %vm783, %v1234
        %1251 = vst.msk [vmem:[%s163 + $0x70] sm:$0xff] %vm783, %v1235
        %1252 = vst.msk [vmem:[%s163 + $0x78] sm:$0xff] %vm783, %v1236
        %p1253 = scmp.lt.s32.totalorder %s16, 1
        %s1254 = scalar_select %p1253, %s16, 1
        %s1255 = smul.addr %s1254, 16
        %s1256 = smul.addr %s1255, 8
        %s1257 = scalar_lea.vmem %s2, %s1256
        // Predicated region
        $region33: #{tpu_custom_call.1} parent=27 // pred_check
          %p1258 = pneg %p81
        $region34: #{tpu_custom_call.1} parent=27 // pred_check_branch
          %1260 = sbr.rel (%p1258) target = $region36
        $region35: #{tpu_custom_call.1} parent=27 // pred_region
          _
        $region36: #{tpu_custom_call.1} parent=27 // pred_fallthru
          _
      $region28: #{tpu_custom_call.1} parent=5 // pred_fallthru
        _
      %p1261 = scmp.le.s32.totalorder 2, %s11
      // Predicated region
      $region37: #{tpu_custom_call.1} parent=5 // pred_check
        %p1262 = pneg %p1261
      $region38: #{tpu_custom_call.1} parent=5 // pred_check_branch
        %1264 = sbr.rel (%p1262) target = $region40
      $region39: #{tpu_custom_call.1} parent=5 // pred_region
        %s1265 = ssub.s32 %s11, 2
        // Predicated region
        $region41: #{tpu_custom_call.1} parent=39 // pred_check
          %p1266 = pneg %p87
        $region42: #{tpu_custom_call.1} parent=39 // pred_check_branch
          %1268 = sbr.rel (%p1266) target = $region44
        $region43: #{tpu_custom_call.1} parent=39 // pred_region
          %p1269 = scmp.lt.s32.totalorder %s17, 1
          %s1270 = scalar_select %p1269, %s17, 1
          %s1271 = smul.addr %s1270, 16
          %s1272 = smul.addr %s1271, 8
          %s1273 = scalar_lea.vmem %s2, %s1272
        $region44: #{tpu_custom_call.1} parent=39 // pred_fallthru
          _
      $region40: #{tpu_custom_call.1} parent=5 // pred_fallthru
        _
    $region6: #{tpu_custom_call.1} parent=1 // loop_footer
      %s15 = sadd.s32 1, %s11
    $region7: #{tpu_custom_call.1} parent=1 // loop_footer_branch
      %10 = sbr.rel target = $region3
    $region8: #{tpu_custom_call.1} parent=1 // loop_exit
      _
    %1274 = vsyncpa [#allocation3], 1
    %s1275 = scalar_lea.sflag [#allocation3], 1
    %1276 = vsyncpa %s1275, 1

</llo_original>
